<compile_context>
chip_gen: v7x
topology: tpu7x:2x2x1
jax: 0.10.0
libtpu: 0.0.40
codegen_flags: <defaults>
</compile_context>

<pallas_src>
import jax
import jax.numpy as jnp
from jax.experimental import pallas as pl
from jax.experimental.pallas import tpu as pltpu

MARGIN = 0.5
COS_EPS = 1e-8      # F.cosine_similarity default eps
CLAMP_MIN = 1e-6    # .clamp(min=1e-06)


def _make_kernel(seq_len):
    inv_s = 1.0 / float(seq_len)

    def kernel(text_ref, pos_ref, neg_ref,       # inputs  (B_TILE, S_TILE, H)
               anchor_ref, negsim_ref,           # outputs (B_TILE, 1)
               t_acc, p_acc, n_acc):             # scratch (B_TILE, H) f32
        s = pl.program_id(1)

        @pl.when(s == 0)
        def _():
            t_acc[...] = jnp.zeros_like(t_acc)
            p_acc[...] = jnp.zeros_like(p_acc)
            n_acc[...] = jnp.zeros_like(n_acc)

        # Partial sequence sums for this S tile (upcast to f32 for accumulation).
        t_acc[...] += jnp.sum(text_ref[...].astype(jnp.float32), axis=1)
        p_acc[...] += jnp.sum(pos_ref[...].astype(jnp.float32), axis=1)
        n_acc[...] += jnp.sum(neg_ref[...].astype(jnp.float32), axis=1)

        @pl.when(s == pl.num_programs(1) - 1)
        def _():
            # Means over the sequence axis (AvgPooler).
            t = t_acc[...] * inv_s
            p = p_acc[...] * inv_s
            n = n_acc[...] * inv_s

            def cosine(a, b):
                dot = jnp.sum(a * b, axis=-1, keepdims=True)          # (B_TILE, 1)
                na = jnp.sqrt(jnp.sum(a * a, axis=-1, keepdims=True))
                nb = jnp.sqrt(jnp.sum(b * b, axis=-1, keepdims=True))
                return dot / jnp.maximum(na * nb, COS_EPS)

            anchor_ref[...] = cosine(t, p)
            negsim_ref[...] = cosine(t, n)

    return kernel


def _pick_b_tile(B):
    # Keep the output block's second-to-last dim either == B or a multiple of 8.
    if B % 8 == 0:
        return min(B, 8)
    return B


def _pick_s_tile(S, b_tile, H, itemsize, budget=16 * 1024 * 1024):
    # Largest tile (<=512 rows, divisor of S) whose 3x double-buffered tiles fit
    # the budget; fall back to the full sequence for small/odd S.
    for c in (512, 256, 128, 64, 32, 16, 8):
        if c <= S and S % c == 0 and 6 * b_tile * c * H * itemsize <= budget:
            return c
    return S


def cosine_train_header(text_hidden, pos_code_hidden, neg_code_hidden,
                        *, b_tile=None, s_tile=None):
    """Returns (loss, anchor_sim, neg_sim) matching the PyTorch forward."""
    B, S, H = text_hidden.shape
    itemsize = jnp.dtype(text_hidden.dtype).itemsize

    b_tile = _pick_b_tile(B) if b_tile is None else b_tile
    s_tile = _pick_s_tile(S, b_tile, H, itemsize) if s_tile is None else s_tile
    assert B % b_tile == 0 and S % s_tile == 0

    grid = (B // b_tile, S // s_tile)

    # VMEM budget: 3 inputs x 2 pipeline buffers + accumulators + outputs (+slack),
    # capped at 32 MiB so it is valid on v5e/v6e/v7x scoped VMEM.
    tile_bytes = 3 * 2 * b_tile * s_tile * H * itemsize
    acc_bytes = 3 * b_tile * max(H, 128) * 4
    out_bytes = 2 * 2 * max(b_tile, 8) * 128 * 4
    vmem_limit = int(2 * (tile_bytes + acc_bytes + out_bytes)) + (2 << 20)
    vmem_limit = min(max(vmem_limit, 8 << 20), 32 << 20)

    cost = pl.CostEstimate(
        flops=int(3 * B * S * H + 10 * B * H),
        bytes_accessed=int(3 * B * S * H * itemsize + 2 * B * 4),
        transcendentals=int(4 * B),
    )

    in_spec = pl.BlockSpec((b_tile, s_tile, H), lambda b, s: (b, s, 0))
    out_spec = pl.BlockSpec((b_tile, 1), lambda b, s: (b, 0))

    anchor, negsim = pl.pallas_call(
        _make_kernel(S),
        out_shape=(
            jax.ShapeDtypeStruct((B, 1), jnp.float32),
            jax.ShapeDtypeStruct((B, 1), jnp.float32),
        ),
        grid_spec=pltpu.PrefetchScalarGridSpec(
            num_scalar_prefetch=0,
            grid=grid,
            in_specs=[in_spec, in_spec, in_spec],
            out_specs=(out_spec, out_spec),
            scratch_shapes=[pltpu.VMEM((b_tile, H), jnp.float32)] * 3,
        ),
        compiler_params=pltpu.CompilerParams(
            dimension_semantics=("parallel", "arbitrary"),
            vmem_limit_bytes=vmem_limit,
        ),
        cost_estimate=cost,
    )(text_hidden, pos_code_hidden, neg_code_hidden)

    anchor_sim = anchor[:, 0]
    neg_sim = negsim[:, 0]
    # Final scalar loss is a trivial mean over B elements; do it in the wrapper
    # (keeps the kernel epilogue off the DMA path and avoids a padded (1,1) output).
    loss = jnp.mean(jnp.maximum(MARGIN - anchor_sim + neg_sim, CLAMP_MIN))
    return loss, anchor_sim, neg_sim


def _reference(text_hidden, pos_code_hidden, neg_code_hidden):
    t = jnp.mean(text_hidden.astype(jnp.float32), axis=1)
    p = jnp.mean(pos_code_hidden.astype(jnp.float32), axis=1)
    n = jnp.mean(neg_code_hidden.astype(jnp.float32), axis=1)

    def cos(a, b):
        num = jnp.sum(a * b, axis=-1)
        den = jnp.maximum(
            jnp.linalg.norm(a, axis=-1) * jnp.linalg.norm(b, axis=-1), COS_EPS)
        return num / den

    a_sim = cos(t, p)
    n_sim = cos(t, n)
    loss = jnp.mean(jnp.maximum(MARGIN - a_sim + n_sim, CLAMP_MIN))
    return loss, a_sim, n_sim


def _check(text, pos, neg, **kw):
    loss, a, n = jax.jit(
        lambda x, y, z: cosine_train_header(x, y, z, **kw))(text, pos, neg)
    jax.block_until_ready((loss, a, n))
    rl, ra, rn = _reference(text, pos, neg)
    assert jnp.allclose(loss, rl, atol=1e-5), (loss, rl)
    assert jnp.allclose(a, ra, atol=1e-5)
    assert jnp.allclose(n, rn, atol=1e-5)


if __name__ == "__main__":
    key = jax.random.PRNGKey(0)
    k1, k2, k3 = jax.random.split(key, 3)

    # Small shapes consistent with the module: batch=2, seq=8, hidden=32.
    B, S, H = 2, 8, 32
    text_hidden = jax.random.normal(k1, (B, S, H), dtype=jnp.float32)
    pos_code_hidden = jax.random.normal(k2, (B, S, H), dtype=jnp.float32)
    neg_code_hidden = jax.random.normal(k3, (B, S, H), dtype=jnp.float32)
    _check(text_hidden, pos_code_hidden, neg_code_hidden)

    # Second check exercising the multi-step S-reduction grid and batch tiling.
    B2, S2, H2 = 8, 256, 128
    k4, k5, k6 = jax.random.split(jax.random.PRNGKey(1), 3)
    t2 = jax.random.normal(k4, (B2, S2, H2), dtype=jnp.float32)
    p2 = jax.random.normal(k5, (B2, S2, H2), dtype=jnp.float32)
    n2 = jax.random.normal(k6, (B2, S2, H2), dtype=jnp.float32)
    _check(t2, p2, n2, b_tile=8, s_tile=64)   # grid = (1, 4)

    print("KERNEL_OK")
</pallas_src>

<mosaic_0001>
module attributes {stable_mosaic.version = 11 : i64} {
  func.func @kernel(%arg0: i32, %arg1: i32, %arg2: memref<2x8x32xf32, #tpu.memory_space<vmem>>, %arg3: memref<2x8x32xf32, #tpu.memory_space<vmem>>, %arg4: memref<2x8x32xf32, #tpu.memory_space<vmem>>, %arg5: memref<2x1xf32, #tpu.memory_space<vmem>>, %arg6: memref<2x1xf32, #tpu.memory_space<vmem>>, %arg7: memref<2x32xf32, #tpu.memory_space<vmem>>, %arg8: memref<2x32xf32, #tpu.memory_space<vmem>>, %arg9: memref<2x32xf32, #tpu.memory_space<vmem>>) attributes {dimension_semantics = [#tpu.dimension_semantics<parallel>, #tpu.dimension_semantics<arbitrary>], iteration_bounds = array<i64: 1, 1>, scalar_prefetch = 0 : i64, scratch_operands = 3 : i64, tpu.core_type = #tpu.core_type<tc>, window_params = [{transform_indices = @transform_0, window_bounds = array<i64: 2, 8, 32>}, {transform_indices = @transform_1, window_bounds = array<i64: 2, 8, 32>}, {transform_indices = @transform_2, window_bounds = array<i64: 2, 8, 32>}, {transform_indices = @transform_3, window_bounds = array<i64: 2, 1>}, {transform_indices = @transform_4, window_bounds = array<i64: 2, 1>}]} {
    %c0_i32 = arith.constant 0 : i32
    %0 = arith.cmpi eq, %arg1, %c0_i32 : i32
    %1 = arith.extui %0 : i1 to i32
    %c0_i32_0 = arith.constant 0 : i32
    %2 = arith.cmpi ne, %1, %c0_i32_0 : i32
    scf.if %2 {
      %cst_25 = arith.constant 0.000000e+00 : f32
      %21 = vector.broadcast %cst_25 : f32 to vector<2x32xf32>
      %c0_26 = arith.constant 0 : index
      %c0_27 = arith.constant 0 : index
      %22 = vector.load %arg7[%c0_26, %c0_27] : memref<2x32xf32, #tpu.memory_space<vmem>>, vector<2x32xf32>
      tpu.vector_store %arg7[%c0_26, %c0_27], %21 {strides = array<i32>} : memref<2x32xf32, #tpu.memory_space<vmem>>, vector<2x32xf32>,
      %cst_28 = arith.constant 0.000000e+00 : f32
      %23 = vector.broadcast %cst_28 : f32 to vector<2x32xf32>
      %c0_29 = arith.constant 0 : index
      %c0_30 = arith.constant 0 : index
      %24 = vector.load %arg8[%c0_29, %c0_30] : memref<2x32xf32, #tpu.memory_space<vmem>>, vector<2x32xf32>
      tpu.vector_store %arg8[%c0_29, %c0_30], %23 {strides = array<i32>} : memref<2x32xf32, #tpu.memory_space<vmem>>, vector<2x32xf32>,
      %cst_31 = arith.constant 0.000000e+00 : f32
      %25 = vector.broadcast %cst_31 : f32 to vector<2x32xf32>
      %c0_32 = arith.constant 0 : index
      %c0_33 = arith.constant 0 : index
      %26 = vector.load %arg9[%c0_32, %c0_33] : memref<2x32xf32, #tpu.memory_space<vmem>>, vector<2x32xf32>
      tpu.vector_store %arg9[%c0_32, %c0_33], %25 {strides = array<i32>} : memref<2x32xf32, #tpu.memory_space<vmem>>, vector<2x32xf32>,
    } else {
    }
    %c0 = arith.constant 0 : index
    %c0_1 = arith.constant 0 : index
    %3 = vector.load %arg7[%c0, %c0_1] : memref<2x32xf32, #tpu.memory_space<vmem>>, vector<2x32xf32>
    %c0_2 = arith.constant 0 : index
    %c0_3 = arith.constant 0 : index
    %c0_4 = arith.constant 0 : index
    %4 = vector.load %arg2[%c0_2, %c0_3, %c0_4] : memref<2x8x32xf32, #tpu.memory_space<vmem>>, vector<2x8x32xf32>
    %cst = arith.constant dense<0.000000e+00> : vector<2x32xf32>
    %5 = vector.multi_reduction <add>, %4, %cst [1] : vector<2x8x32xf32> to vector<2x32xf32>
    %6 = arith.addf %3, %5 : vector<2x32xf32>
    %c0_5 = arith.constant 0 : index
    %c0_6 = arith.constant 0 : index
    %7 = vector.load %arg7[%c0_5, %c0_6] : memref<2x32xf32, #tpu.memory_space<vmem>>, vector<2x32xf32>
    tpu.vector_store %arg7[%c0_5, %c0_6], %6 {strides = array<i32>} : memref<2x32xf32, #tpu.memory_space<vmem>>, vector<2x32xf32>,
    %c0_7 = arith.constant 0 : index
    %c0_8 = arith.constant 0 : index
    %8 = vector.load %arg8[%c0_7, %c0_8] : memref<2x32xf32, #tpu.memory_space<vmem>>, vector<2x32xf32>
    %c0_9 = arith.constant 0 : index
    %c0_10 = arith.constant 0 : index
    %c0_11 = arith.constant 0 : index
    %9 = vector.load %arg3[%c0_9, %c0_10, %c0_11] : memref<2x8x32xf32, #tpu.memory_space<vmem>>, vector<2x8x32xf32>
    %cst_12 = arith.constant dense<0.000000e+00> : vector<2x32xf32>
    %10 = vector.multi_reduction <add>, %9, %cst_12 [1] : vector<2x8x32xf32> to vector<2x32xf32>
    %11 = arith.addf %8, %10 : vector<2x32xf32>
    %c0_13 = arith.constant 0 : index
    %c0_14 = arith.constant 0 : index
    %12 = vector.load %arg8[%c0_13, %c0_14] : memref<2x32xf32, #tpu.memory_space<vmem>>, vector<2x32xf32>
    tpu.vector_store %arg8[%c0_13, %c0_14], %11 {strides = array<i32>} : memref<2x32xf32, #tpu.memory_space<vmem>>, vector<2x32xf32>,
    %c0_15 = arith.constant 0 : index
    %c0_16 = arith.constant 0 : index
    %13 = vector.load %arg9[%c0_15, %c0_16] : memref<2x32xf32, #tpu.memory_space<vmem>>, vector<2x32xf32>
    %c0_17 = arith.constant 0 : index
    %c0_18 = arith.constant 0 : index
    %c0_19 = arith.constant 0 : index
    %14 = vector.load %arg4[%c0_17, %c0_18, %c0_19] : memref<2x8x32xf32, #tpu.memory_space<vmem>>, vector<2x8x32xf32>
    %cst_20 = arith.constant dense<0.000000e+00> : vector<2x32xf32>
    %15 = vector.multi_reduction <add>, %14, %cst_20 [1] : vector<2x8x32xf32> to vector<2x32xf32>
    %16 = arith.addf %13, %15 : vector<2x32xf32>
    %c0_21 = arith.constant 0 : index
    %c0_22 = arith.constant 0 : index
    %17 = vector.load %arg9[%c0_21, %c0_22] : memref<2x32xf32, #tpu.memory_space<vmem>>, vector<2x32xf32>
    tpu.vector_store %arg9[%c0_21, %c0_22], %16 {strides = array<i32>} : memref<2x32xf32, #tpu.memory_space<vmem>>, vector<2x32xf32>,
    %c0_i32_23 = arith.constant 0 : i32
    %18 = arith.cmpi eq, %arg1, %c0_i32_23 : i32
    %19 = arith.extui %18 : i1 to i32
    %c0_i32_24 = arith.constant 0 : i32
    %20 = arith.cmpi ne, %19, %c0_i32_24 : i32
    scf.if %20 {
      %c0_25 = arith.constant 0 : index
      %c0_26 = arith.constant 0 : index
      %21 = vector.load %arg7[%c0_25, %c0_26] : memref<2x32xf32, #tpu.memory_space<vmem>>, vector<2x32xf32>
      %cst_27 = arith.constant 1.250000e-01 : f32
      %22 = vector.broadcast %cst_27 : f32 to vector<2x32xf32>
      %23 = arith.mulf %21, %22 : vector<2x32xf32>
      %c0_28 = arith.constant 0 : index
      %c0_29 = arith.constant 0 : index
      %24 = vector.load %arg8[%c0_28, %c0_29] : memref<2x32xf32, #tpu.memory_space<vmem>>, vector<2x32xf32>
      %cst_30 = arith.constant 1.250000e-01 : f32
      %25 = vector.broadcast %cst_30 : f32 to vector<2x32xf32>
      %26 = arith.mulf %24, %25 : vector<2x32xf32>
      %c0_31 = arith.constant 0 : index
      %c0_32 = arith.constant 0 : index
      %27 = vector.load %arg9[%c0_31, %c0_32] : memref<2x32xf32, #tpu.memory_space<vmem>>, vector<2x32xf32>
      %cst_33 = arith.constant 1.250000e-01 : f32
      %28 = vector.broadcast %cst_33 : f32 to vector<2x32xf32>
      %29 = arith.mulf %27, %28 : vector<2x32xf32>
      %30 = arith.mulf %23, %26 : vector<2x32xf32>
      %cst_34 = arith.constant dense<0.000000e+00> : vector<2xf32>
      %31 = vector.multi_reduction <add>, %30, %cst_34 [1] : vector<2x32xf32> to vector<2xf32>
      %32 = vector.shape_cast %31 : vector<2xf32> to vector<2x1xf32>
      %33 = arith.mulf %23, %23 : vector<2x32xf32>
      %cst_35 = arith.constant dense<0.000000e+00> : vector<2xf32>
      %34 = vector.multi_reduction <add>, %33, %cst_35 [1] : vector<2x32xf32> to vector<2xf32>
      %35 = vector.shape_cast %34 : vector<2xf32> to vector<2x1xf32>
      %36 = math.sqrt %35 : vector<2x1xf32>
      %37 = arith.mulf %26, %26 : vector<2x32xf32>
      %cst_36 = arith.constant dense<0.000000e+00> : vector<2xf32>
      %38 = vector.multi_reduction <add>, %37, %cst_36 [1] : vector<2x32xf32> to vector<2xf32>
      %39 = vector.shape_cast %38 : vector<2xf32> to vector<2x1xf32>
      %40 = math.sqrt %39 : vector<2x1xf32>
      %41 = arith.mulf %36, %40 : vector<2x1xf32>
      %cst_37 = arith.constant 9.99999993E-9 : f32
      %42 = vector.broadcast %cst_37 : f32 to vector<2x1xf32>
      %43 = arith.maximumf %41, %42 : vector<2x1xf32>
      %44 = arith.divf %32, %43 : vector<2x1xf32>
      %c0_38 = arith.constant 0 : index
      %c0_39 = arith.constant 0 : index
      %45 = vector.load %arg5[%c0_38, %c0_39] : memref<2x1xf32, #tpu.memory_space<vmem>>, vector<2x1xf32>
      tpu.vector_store %arg5[%c0_38, %c0_39], %44 {strides = array<i32>} : memref<2x1xf32, #tpu.memory_space<vmem>>, vector<2x1xf32>,
      %46 = arith.mulf %23, %29 : vector<2x32xf32>
      %cst_40 = arith.constant dense<0.000000e+00> : vector<2xf32>
      %47 = vector.multi_reduction <add>, %46, %cst_40 [1] : vector<2x32xf32> to vector<2xf32>
      %48 = vector.shape_cast %47 : vector<2xf32> to vector<2x1xf32>
      %49 = arith.mulf %23, %23 : vector<2x32xf32>
      %cst_41 = arith.constant dense<0.000000e+00> : vector<2xf32>
      %50 = vector.multi_reduction <add>, %49, %cst_41 [1] : vector<2x32xf32> to vector<2xf32>
      %51 = vector.shape_cast %50 : vector<2xf32> to vector<2x1xf32>
      %52 = math.sqrt %51 : vector<2x1xf32>
      %53 = arith.mulf %29, %29 : vector<2x32xf32>
      %cst_42 = arith.constant dense<0.000000e+00> : vector<2xf32>
      %54 = vector.multi_reduction <add>, %53, %cst_42 [1] : vector<2x32xf32> to vector<2xf32>
      %55 = vector.shape_cast %54 : vector<2xf32> to vector<2x1xf32>
      %56 = math.sqrt %55 : vector<2x1xf32>
      %57 = arith.mulf %52, %56 : vector<2x1xf32>
      %cst_43 = arith.constant 9.99999993E-9 : f32
      %58 = vector.broadcast %cst_43 : f32 to vector<2x1xf32>
      %59 = arith.maximumf %57, %58 : vector<2x1xf32>
      %60 = arith.divf %48, %59 : vector<2x1xf32>
      %c0_44 = arith.constant 0 : index
      %c0_45 = arith.constant 0 : index
      %61 = vector.load %arg6[%c0_44, %c0_45] : memref<2x1xf32, #tpu.memory_space<vmem>>, vector<2x1xf32>
      tpu.vector_store %arg6[%c0_44, %c0_45], %60 {strides = array<i32>} : memref<2x1xf32, #tpu.memory_space<vmem>>, vector<2x1xf32>,
    } else {
    }
    return
  }
  func.func @transform_0(%arg0: i32, %arg1: i32) -> (i32, i32, i32) {
    %c0_i32 = arith.constant 0 : i32
    %c0_i32_0 = arith.constant 0 : i32
    return %arg0, %arg1, %c0_i32 : i32, i32, i32
  }
  func.func @transform_1(%arg0: i32, %arg1: i32) -> (i32, i32, i32) {
    %c0_i32 = arith.constant 0 : i32
    %c0_i32_0 = arith.constant 0 : i32
    return %arg0, %arg1, %c0_i32 : i32, i32, i32
  }
  func.func @transform_2(%arg0: i32, %arg1: i32) -> (i32, i32, i32) {
    %c0_i32 = arith.constant 0 : i32
    %c0_i32_0 = arith.constant 0 : i32
    return %arg0, %arg1, %c0_i32 : i32, i32, i32
  }
  func.func @transform_3(%arg0: i32, %arg1: i32) -> (i32, i32) {
    %c0_i32 = arith.constant 0 : i32
    %c0_i32_0 = arith.constant 0 : i32
    return %arg0, %c0_i32 : i32, i32
  }
  func.func @transform_4(%arg0: i32, %arg1: i32) -> (i32, i32) {
    %c0_i32 = arith.constant 0 : i32
    %c0_i32_0 = arith.constant 0 : i32
    return %arg0, %c0_i32 : i32, i32
  }
}

</mosaic_0001>

<llo_original>
// kernel: _lambda_.1
$region0: #{_lambda_.1}
  #allocation0 [shape = 'u32[]', space=smem, size = 0x4, offset = 0x4, fixed_abs, tag = 'smem constant byte address 0x4 - core index']
  #allocation1 [shape = 'u32[144,128]{1,0:T(1,128)}', space=vmem, size = 0x12000, scoped, tag = 'internal scratch']
  #allocation2 [shape = 'f32[2,32]{1,0:T(2,128)}', space=vmem, size = 0x400, scoped, tag = 'scratch operand']
  #allocation3 [shape = 'f32[2,32]{1,0:T(2,128)}', space=vmem, size = 0x400, scoped, tag = 'scratch operand']
  #allocation4 [shape = 'f32[2,32]{1,0:T(2,128)}', space=vmem, size = 0x400, scoped, tag = 'scratch operand']
  %s0 = inlined_call_operand.hbm [shape: f32[2,8,32], index: 0, kind: input, shape index: {}]
  %s1 = inlined_call_operand.hbm [shape: f32[2,8,32], index: 1, kind: input, shape index: {}]
  %s2 = inlined_call_operand.hbm [shape: f32[2,8,32], index: 2, kind: input, shape index: {}]
  %s3 = inlined_call_operand.vmem [shape: f32[2,1], index: 3, kind: output, shape index: {0}]
  %s4 = inlined_call_operand.vmem [shape: f32[2,1], index: 4, kind: output, shape index: {1}]
  %5 = xla_tuple %s3, %s4
  %s6 = sld [smem:[#allocation0]]
  $region50: #{_lambda_.1} parent=0
    _
  %s8 = ssub.s32 1, %s6
  %s9 = scalar_select 0, %s8, %s6
  $region1: #{_lambda_.1} parent=0
    #allocation5 [shape = 'u8[8192]{0}', space=vmem, size = 0x2000, scoped, tag = 'input window, operand 0, single buffered']
    #allocation6 [shape = 's32[1]{0}', space=sflag, size = 0x4, scoped, tag = 'scoped memory for _lambda_.1']
    #allocation7 [shape = 'u8[8192]{0}', space=vmem, size = 0x2000, scoped, tag = 'input window, operand 1, single buffered']
    #allocation8 [shape = 's32[1]{0}', space=sflag, size = 0x4, scoped, tag = 'scoped memory for _lambda_.1']
    #allocation9 [shape = 'u8[8192]{0}', space=vmem, size = 0x2000, scoped, tag = 'input window, operand 2, single buffered']
    %10 = vsyncpa [#allocation6], 0
    %11 = vsyncpa [#allocation8], 0
    // Predicated region
    $region2: #{_lambda_.1} parent=1 // pred_check
      _
    $region3: #{_lambda_.1} parent=1 // pred_check_branch
      %13 = sbr.rel (0) target = $region5
    $region4: #{_lambda_.1} parent=1 // pred_region
      %s15 = ssub.s32 256, 256
      %16 = vsyncadd [#allocation6], %s15
      %s17 = sshll.u32 [#allocation5], 4
      %s18 = int_to_ptr.vmem [resolvable:$true] %s17
      %23 = dma.hbm_to_vmem [thread:$0]  %s0, 256, %s18, [#allocation6], 128, 128, 8
    $region5: #{_lambda_.1} parent=1 // pred_fallthru
      _
    // Predicated region
    $region6: #{_lambda_.1} parent=1 // pred_check
      _
    $region7: #{_lambda_.1} parent=1 // pred_check_branch
      %25 = sbr.rel (0) target = $region9
    $region8: #{_lambda_.1} parent=1 // pred_region
      %s27 = ssub.s32 256, 256
      %28 = vsyncadd [#allocation8], %s27
      %s29 = sshll.u32 [#allocation7], 4
      %s30 = int_to_ptr.vmem [resolvable:$true] %s29
      %35 = dma.hbm_to_vmem [thread:$0]  %s1, 256, %s30, [#allocation8], 128, 128, 8
    $region9: #{_lambda_.1} parent=1 // pred_fallthru
      _
    // Predicated region
    $region10: #{_lambda_.1} parent=1 // pred_check
      _
    $region11: #{_lambda_.1} parent=1 // pred_check_branch
      %37 = sbr.rel (0) target = $region13
    $region12: #{_lambda_.1} parent=1 // pred_region
      %s39 = ssub.s32 256, 256
      %40 = vsyncadd [#allocation8], %s39
      %s41 = sshll.u32 [#allocation9], 4
      %s42 = int_to_ptr.vmem [resolvable:$true] %s41
      %47 = dma.hbm_to_vmem [thread:$0]  %s2, 256, %s42, [#allocation8], 128, 128, 8
    $region13: #{_lambda_.1} parent=1 // pred_fallthru
      _
    // Predicated region
    $region14: #{_lambda_.1} parent=1 // pred_check
      _
    $region15: #{_lambda_.1} parent=1 // pred_check_branch
      %49 = sbr.rel (0) target = $region17
    $region16: #{_lambda_.1} parent=1 // pred_region
      %50 = dma.done [#allocation6], 256
    $region17: #{_lambda_.1} parent=1 // pred_fallthru
      _
    // Predicated region
    $region18: #{_lambda_.1} parent=1 // pred_check
      _
    $region19: #{_lambda_.1} parent=1 // pred_check_branch
      %52 = sbr.rel (0) target = $region21
    $region20: #{_lambda_.1} parent=1 // pred_region
      %53 = dma.done [#allocation8], 256
    $region21: #{_lambda_.1} parent=1 // pred_fallthru
      _
    // Predicated region
    $region22: #{_lambda_.1} parent=1 // pred_check
      _
    $region23: #{_lambda_.1} parent=1 // pred_check_branch
      %55 = sbr.rel (0) target = $region25
    $region24: #{_lambda_.1} parent=1 // pred_region
      %56 = dma.done [#allocation8], 256
    $region25: #{_lambda_.1} parent=1 // pred_fallthru
      _
    %p57 = scmp.eq.s32.totalorder 0, 0
    // Predicated region
    $region26: #{_lambda_.1} parent=1 // pred_check
      %p58 = pneg %p57
    $region27: #{_lambda_.1} parent=1 // pred_check_branch
      %60 = sbr.rel (%p58) target = $region29
    $region28: #{_lambda_.1} parent=1 // pred_region
      %vm61 = vcmask 254976
      %62 = vst.msk [vmem:[#allocation2] sm:$0x3] %vm61, 0.0
      %63 = vst.msk [vmem:[#allocation3] sm:$0x3] %vm61, 0.0
      %64 = vst.msk [vmem:[#allocation4] sm:$0x3] %vm61, 0.0
    $region29: #{_lambda_.1} parent=1 // pred_fallthru
      _
    %v65 = vld [vmem:[#allocation2] sm:$0x3]
    %v66 = vld [vmem:[#allocation5] sm:$0xff]
    %v67 = vld [vmem:[#allocation5 + $0x8] sm:$0xff]
    %vm68 = vcmask 261120
    %v69 = vsel %vm68, %v66, 0.0
    %v70 = vrot.slane %v69, 4
    %v71 = vadd.f32 %v69, %v70
    %v72 = vrot.slane %v71, 2
    %v73 = vadd.f32 %v71, %v72
    %v74 = vrot.slane %v73, 1
    %v75 = vadd.f32 %v73, %v74
    %v76 = vsel %vm68, %v67, 0.0
    %v77 = vrot.slane %v76, 4
    %v78 = vadd.f32 %v76, %v77
    %v79 = vrot.slane %v78, 2
    %v80 = vadd.f32 %v78, %v79
    %v81 = vrot.slane %v80, 1
    %v82 = vadd.f32 %v80, %v81
    %vm85 = vcmask 1041409
    %v86 = vsel %vm85, %v82, %v75
    %v88 = vadd.f32 %v65, %v86
    %vm89 = vcmask 254976
    %90 = vst.msk [vmem:[#allocation2] sm:$0x3] %vm89, %v88
    %v91 = vld [vmem:[#allocation3] sm:$0x3]
    %v92 = vld [vmem:[#allocation7] sm:$0xff]
    %v93 = vld [vmem:[#allocation7 + $0x8] sm:$0xff]
    %v94 = vsel %vm68, %v92, 0.0
    %v95 = vrot.slane %v94, 4
    %v96 = vadd.f32 %v94, %v95
    %v97 = vrot.slane %v96, 2
    %v98 = vadd.f32 %v96, %v97
    %v99 = vrot.slane %v98, 1
    %v100 = vadd.f32 %v98, %v99
    %v101 = vsel %vm68, %v93, 0.0
    %v102 = vrot.slane %v101, 4
    %v103 = vadd.f32 %v101, %v102
    %v104 = vrot.slane %v103, 2
    %v105 = vadd.f32 %v103, %v104
    %v106 = vrot.slane %v105, 1
    %v107 = vadd.f32 %v105, %v106
    %v110 = vsel %vm85, %v107, %v100
    %v112 = vadd.f32 %v91, %v110
    %113 = vst.msk [vmem:[#allocation3] sm:$0x3] %vm89, %v112
    %v114 = vld [vmem:[#allocation4] sm:$0x3]
    %v115 = vld [vmem:[#allocation9] sm:$0xff]
    %v116 = vld [vmem:[#allocation9 + $0x8] sm:$0xff]
    %v117 = vsel %vm68, %v115, 0.0
    %v118 = vrot.slane %v117, 4
    %v119 = vadd.f32 %v117, %v118
    %v120 = vrot.slane %v119, 2
    %v121 = vadd.f32 %v119, %v120
    %v122 = vrot.slane %v121, 1
    %v123 = vadd.f32 %v121, %v122
    %v124 = vsel %vm68, %v116, 0.0
    %v125 = vrot.slane %v124, 4
    %v126 = vadd.f32 %v124, %v125
    %v127 = vrot.slane %v126, 2
    %v128 = vadd.f32 %v126, %v127
    %v129 = vrot.slane %v128, 1
    %v130 = vadd.f32 %v128, %v129
    %v133 = vsel %vm85, %v130, %v123
    %v135 = vadd.f32 %v114, %v133
    %136 = vst.msk [vmem:[#allocation4] sm:$0x3] %vm89, %v135
    // Predicated region
    $region30: #{_lambda_.1} parent=1 // pred_check
      %p137 = pneg %p57
    $region31: #{_lambda_.1} parent=1 // pred_check_branch
      %139 = sbr.rel (%p137) target = $region33
    $region32: #{_lambda_.1} parent=1 // pred_region
      %v140 = vld [vmem:[#allocation2] sm:$0x3]
      %v141 = vmul.f32 %v140, 0.125
      %v142 = vld [vmem:[#allocation3] sm:$0x3]
      %v143 = vmul.f32 %v142, 0.125
      %v144 = vld [vmem:[#allocation4] sm:$0x3]
      %v145 = vmul.f32 %v144, 0.125
      %v146 = vmul.f32 %v141, %v143
      %v147 = vsel %vm89, %v146, 0.0
      %148 = vadd.xlane.f32.xlu0 %v147
      %v149 = vpop.xlane.xlu0 %148
      %v150 = vmul.f32 %v141, %v141
      %v151 = vsel %vm89, %v150, 0.0
      %152 = vadd.xlane.f32.xlu0 %v151
      %v153 = vpop.xlane.xlu0 %152
      %v154 = vrsqrt.pop %v153
      %v155 = vmul.f32 %v153, %v154
      %vm156 = vcmp.eq.f32.partialorder %v153, inf
      %v157 = vsel %vm156, %v153, %v155
      %vm158 = vcmp.eq.f32.partialorder %v153, 0.0
      %v159 = vand.u32 %v153, 2147483648
      %v160 = vsel %vm158, %v159, %v157
      %v161 = vmul.f32 %v143, %v143
      %v162 = vsel %vm89, %v161, 0.0
      %163 = vadd.xlane.f32.xlu0 %v162
      %v164 = vpop.xlane.xlu0 %163
      %v165 = vrsqrt.pop %v164
      %v166 = vmul.f32 %v164, %v165
      %vm167 = vcmp.eq.f32.partialorder %v164, inf
      %v168 = vsel %vm167, %v164, %v166
      %vm169 = vcmp.eq.f32.partialorder %v164, 0.0
      %v170 = vand.u32 %v164, 2147483648
      %v171 = vsel %vm169, %v170, %v168
      %v172 = vmul.f32 %v160, %v171
      %v173 = vmax.f32 %v172, 1e-08
      %v174 = vrcp.pop %v173
      %v175 = vmul.f32 %v149, %v174
      %vm176 = vcmask 1024
      %177 = vst.msk [vmem:[%s3] sm:$0x3] %vm176, %v175
      %v178 = vmul.f32 %v141, %v145
      %v179 = vsel %vm89, %v178, 0.0
      %180 = vadd.xlane.f32.xlu0 %v179
      %v181 = vpop.xlane.xlu0 %180
      %v182 = vmul.f32 %v145, %v145
      %v183 = vsel %vm89, %v182, 0.0
      %184 = vadd.xlane.f32.xlu0 %v183
      %v185 = vpop.xlane.xlu0 %184
      %v186 = vrsqrt.pop %v185
      %v187 = vmul.f32 %v185, %v186
      %vm188 = vcmp.eq.f32.partialorder %v185, inf
      %v189 = vsel %vm188, %v185, %v187
      %vm190 = vcmp.eq.f32.partialorder %v185, 0.0
      %v191 = vand.u32 %v185, 2147483648
      %v192 = vsel %vm190, %v191, %v189
      %v193 = vmul.f32 %v160, %v192
      %v194 = vmax.f32 %v193, 1e-08
      %v195 = vrcp.pop %v194
      %v196 = vmul.f32 %v181, %v195
      %197 = vst.msk [vmem:[%s4] sm:$0x3] %vm176, %v196
    $region33: #{_lambda_.1} parent=1 // pred_fallthru
      _
    // Predicated region
    $region34: #{_lambda_.1} parent=1 // pred_check
      _
    $region35: #{_lambda_.1} parent=1 // pred_check_branch
      %199 = sbr.rel (0) target = $region37
    $region36: #{_lambda_.1} parent=1 // pred_region
      _
    $region37: #{_lambda_.1} parent=1 // pred_fallthru
      _
    // Predicated region
    $region38: #{_lambda_.1} parent=1 // pred_check
      _
    $region39: #{_lambda_.1} parent=1 // pred_check_branch
      %201 = sbr.rel (0) target = $region41
    $region40: #{_lambda_.1} parent=1 // pred_region
      _
    $region41: #{_lambda_.1} parent=1 // pred_fallthru
      _
    // Predicated region
    $region42: #{_lambda_.1} parent=1 // pred_check
      _
    $region43: #{_lambda_.1} parent=1 // pred_check_branch
      %203 = sbr.rel (0) target = $region45
    $region44: #{_lambda_.1} parent=1 // pred_region
      _
    $region45: #{_lambda_.1} parent=1 // pred_fallthru
      _
    // Predicated region
    $region46: #{_lambda_.1} parent=1 // pred_check
      _
    $region47: #{_lambda_.1} parent=1 // pred_check_branch
      %205 = sbr.rel (0) target = $region49
    $region48: #{_lambda_.1} parent=1 // pred_region
      _
    $region49: #{_lambda_.1} parent=1 // pred_fallthru
      _
    %206 = vsyncpa [#allocation6], 1
    %207 = vsyncpa [#allocation8], 1

</llo_original>
